<compile_context>
chip_gen: v7x
topology: tpu7x:2x2x1
jax: 0.10.0
libtpu: 0.0.40
codegen_flags: <defaults>
</compile_context>

<pallas_src>
import jax
import jax.numpy as jnp
import numpy as np
from jax.experimental import pallas as pl
from jax.experimental.pallas import tpu as pltpu

NUM_TIMESTEPS = 1000
NUMBER_TARGETS = 1
UNCER_STEP = 4          # number of independent ddim sample chains
NUM_DDIM_STEPS = 4      # space_timesteps(1000, [4])

_VMEM_LIMIT = 32 * 1024 * 1024   # explicit, with headroom on all generations


# ----------------------------------------------------------------------------
# Diffusion schedule (plain-JAX parameter setup, matches
# get_named_beta_schedule('linear', 1000))
# ----------------------------------------------------------------------------
def linear_beta_schedule(num_steps: int):
    scale = 1000.0 / num_steps
    beta_start = scale * 0.0001
    beta_end = scale * 0.02
    betas = np.linspace(beta_start, beta_end, num_steps, dtype=np.float64)
    alphas = 1.0 - betas
    alphas_cumprod = np.cumprod(alphas)
    sqrt_ac = np.sqrt(alphas_cumprod).astype(np.float32)
    sqrt_1m_ac = np.sqrt(1.0 - alphas_cumprod).astype(np.float32)
    return jnp.asarray(sqrt_ac), jnp.asarray(sqrt_1m_ac)


# ----------------------------------------------------------------------------
# Tiling helper: lane-dense reshape + row tiling.
#   lane  : largest power-of-two multiple of 128 dividing N (capped at 1024)
#   rows  : N // lane
#   tile_rows : largest multiple-of-8 divisor of rows whose chunk fits the
#               element budget; falls back to the full extent (always legal).
# ----------------------------------------------------------------------------
def _choose_tiling(n_elems: int, max_chunk_elems: int):
    assert n_elems % 128 == 0, "flattened volume must be lane aligned"
    lane = 128
    while lane * 2 <= 1024 and n_elems % (lane * 2) == 0:
        lane *= 2
    rows = n_elems // lane
    tile_rows = rows                       # full extent is always a legal block dim
    best = None
    tr = 8
    while tr <= rows:
        if rows % tr == 0 and tr * lane <= max_chunk_elems:
            best = tr
        tr += 8
    if best is not None:
        tile_rows = best
    return lane, rows, tile_rows


# ----------------------------------------------------------------------------
# Kernel 1: q_sample
#   out[b] = sqrt_alphas_cumprod[t[b]] * x[b]
#          + sqrt_one_minus_alphas_cumprod[t[b]] * noise[b]
# ----------------------------------------------------------------------------
def _q_sample_kernel(t_ref, sa_ref, s1m_ref, x_ref, n_ref, o_ref):
    b = pl.program_id(0)
    t = t_ref[b]                     # scalar int32 from SMEM (scalar prefetch)
    a = sa_ref[t]                    # gather schedule coeffs from SMEM
    s = s1m_ref[t]
    x = x_ref[...].astype(jnp.float32)     # cast in-kernel (free under DMA)
    n = n_ref[...].astype(jnp.float32)
    o_ref[...] = (a * x + s * n).astype(o_ref.dtype)


def q_sample_pallas(x, noise, t, sqrt_ac, sqrt_1m_ac):
    B = x.shape[0]
    N = int(np.prod(x.shape[1:]))
    # ~1 MiB f32 per array per block -> 3 arrays * 2 buffers ~ 6 MiB, fits v5e default.
    lane, rows, tr = _choose_tiling(N, max_chunk_elems=256 * 1024)
    x3 = x.reshape(B, rows, lane)
    n3 = noise.reshape(B, rows, lane)
    row_tiles = rows // tr

    out = pl.pallas_call(
        _q_sample_kernel,
        out_shape=jax.ShapeDtypeStruct((B, rows, lane), x.dtype),
        grid_spec=pltpu.PrefetchScalarGridSpec(
            num_scalar_prefetch=1,               # t -> SMEM
            grid=(B, row_tiles),
            in_specs=[
                pl.BlockSpec(memory_space=pltpu.SMEM),   # sqrt_ac table
                pl.BlockSpec(memory_space=pltpu.SMEM),   # sqrt_1m_ac table
                pl.BlockSpec((pl.Squeezed(), tr, lane),
                             lambda b, r, t: (b, r, 0)),  # x
                pl.BlockSpec((pl.Squeezed(), tr, lane),
                             lambda b, r, t: (b, r, 0)),  # noise
            ],
            out_specs=pl.BlockSpec((pl.Squeezed(), tr, lane),
                                   lambda b, r, t: (b, r, 0)),
        ),
        compiler_params=pltpu.CompilerParams(
            dimension_semantics=("parallel", "parallel"),
            vmem_limit_bytes=_VMEM_LIMIT),
    )(t, sqrt_ac, sqrt_1m_ac, x3, n3)
    return out.reshape(x.shape)


# ----------------------------------------------------------------------------
# Kernel 2: ddim_sample uncertainty-weighted fusion
#   for index in range(4):
#       uncer_out = mean_i model_outputs[index, i]
#       p = clamp(sigmoid(uncer_out), min=0.001)
#       uncer = -p * log(p)                         (compute_uncer)
#       w = exp(sigmoid((index+1)/10) * (1 - uncer))
#       sample_return += w * sum_i samples[index, i]
#
# Grid: (row_tiles, n_idx); row axis parallel (megacore), index axis
# innermost 'arbitrary' with a resident (TR, LANE) accumulator block.
# All intermediates (mean_out / uncer / w) stay in vregs — no scratch stores.
# ----------------------------------------------------------------------------
def _ddim_fusion_kernel(sig_ref, outs_ref, samps_ref, o_ref):
    idx = pl.program_id(1)

    @pl.when(idx == 0)
    def _():
        o_ref[...] = jnp.zeros_like(o_ref)

    outs = outs_ref[...].astype(jnp.float32)     # (U, TR, LANE), cast in-kernel
    samps = samps_ref[...].astype(jnp.float32)
    u = outs.shape[0]

    mean_out = jnp.sum(outs, axis=0) * (1.0 / u)
    p = jax.nn.sigmoid(mean_out)
    p = jnp.maximum(p, 0.001)        # pred_out[pred_out < 0.001] = 0.001
    uncer = -p * jnp.log(p)
    w = jnp.exp(sig_ref[idx] * (1.0 - uncer))
    o_ref[...] += w * jnp.sum(samps, axis=0)


def ddim_fusion_pallas(model_outputs, samples):
    # model_outputs / samples: (NUM_DDIM_STEPS, UNCER_STEP, B, C, D, H, W)
    n_idx, n_u = model_outputs.shape[:2]
    vol_shape = model_outputs.shape[2:]
    N = int(np.prod(vol_shape))
    # per-input block = n_u * TR * LANE * 4 bytes; keep chunk <= 128K elems
    # -> <= 2 MiB per input block at n_u=4 (double-buffered ~9 MiB total).
    lane, rows, tr = _choose_tiling(N, max_chunk_elems=128 * 1024)
    row_tiles = rows // tr

    outs = model_outputs.reshape(n_idx, n_u, rows, lane)    # no wrapper-side cast
    samps = samples.reshape(n_idx, n_u, rows, lane)
    sig = jax.nn.sigmoid(
        jnp.asarray([(i + 1) / 10.0 for i in range(n_idx)], jnp.float32))

    out = pl.pallas_call(
        _ddim_fusion_kernel,
        out_shape=jax.ShapeDtypeStruct((rows, lane), jnp.float32),
        grid_spec=pltpu.PrefetchScalarGridSpec(
            num_scalar_prefetch=0,
            grid=(row_tiles, n_idx),
            in_specs=[
                pl.BlockSpec(memory_space=pltpu.SMEM),                 # sig
                pl.BlockSpec((pl.Squeezed(), n_u, tr, lane),
                             lambda r, i: (i, 0, r, 0)),               # outputs
                pl.BlockSpec((pl.Squeezed(), n_u, tr, lane),
                             lambda r, i: (i, 0, r, 0)),               # samples
            ],
            out_specs=pl.BlockSpec((tr, lane), lambda r, i: (r, 0)),
        ),
        compiler_params=pltpu.CompilerParams(
            # row tiles shard across TCs (v7x megacore); index axis is the
            # resident-accumulator reduction -> arbitrary, innermost.
            dimension_semantics=("parallel", "arbitrary"),
            vmem_limit_bytes=_VMEM_LIMIT),
    )(sig, outs, samps)
    return out.reshape(vol_shape)


# ----------------------------------------------------------------------------
# Pure-JAX references for correctness checking
# ----------------------------------------------------------------------------
def q_sample_ref(x, noise, t, sqrt_ac, sqrt_1m_ac):
    a = sqrt_ac[t].reshape((-1,) + (1,) * (x.ndim - 1))
    s = sqrt_1m_ac[t].reshape((-1,) + (1,) * (x.ndim - 1))
    return a * x + s * noise


def ddim_fusion_ref(model_outputs, samples):
    n_idx, n_u = model_outputs.shape[:2]
    ret = jnp.zeros(model_outputs.shape[2:], jnp.float32)
    for index in range(n_idx):
        uncer_out = jnp.mean(model_outputs[index].astype(jnp.float32), axis=0)
        p = jax.nn.sigmoid(uncer_out)
        p = jnp.maximum(p, 0.001)
        uncer = -p * jnp.log(p)
        w = jnp.exp(jax.nn.sigmoid((index + 1) / 10.0) * (1.0 - uncer))
        for i in range(n_u):
            ret = ret + w * samples[index, i].astype(jnp.float32)
    return ret


# ----------------------------------------------------------------------------
if __name__ == "__main__":
    key = jax.random.PRNGKey(0)
    k_x, k_noise, k_t, k_outs, k_samps = jax.random.split(key, 5)

    sqrt_ac, sqrt_1m_ac = linear_beta_schedule(NUM_TIMESTEPS)

    # ---- q_sample branch (small shapes: B=2, C=1, spatial=16) ----
    B, C, D, H, W = 2, NUMBER_TARGETS, 16, 16, 16
    x = jax.random.normal(k_x, (B, C, D, H, W), jnp.float32)
    noise = jax.random.normal(k_noise, (B, C, D, H, W), jnp.float32)
    # UniformSampler(1000).sample -> uniform timesteps
    t = jax.random.randint(k_t, (B,), 0, NUM_TIMESTEPS, jnp.int32)

    q_out = jax.block_until_ready(q_sample_pallas(x, noise, t, sqrt_ac, sqrt_1m_ac))
    q_ref = q_sample_ref(x, noise, t, sqrt_ac, sqrt_1m_ac)
    np.testing.assert_allclose(np.asarray(q_out), np.asarray(q_ref),
                               rtol=1e-5, atol=1e-5)

    # ---- ddim_sample uncertainty fusion (synthetic sampler outputs) ----
    # TODO(synk): these stand in for ddim_sample_loop(model, (1,1,96,96,96))
    vol = (1, NUMBER_TARGETS, 16, 16, 16)
    model_outputs = jax.random.normal(
        k_outs, (NUM_DDIM_STEPS, UNCER_STEP) + vol, jnp.float32)
    samples = jax.random.normal(
        k_samps, (NUM_DDIM_STEPS, UNCER_STEP) + vol, jnp.float32)

    fused = jax.block_until_ready(ddim_fusion_pallas(model_outputs, samples))
    fused_ref = ddim_fusion_ref(model_outputs, samples)
    np.testing.assert_allclose(np.asarray(fused), np.asarray(fused_ref),
                               rtol=1e-4, atol=1e-4)

    print("KERNEL_OK")
</pallas_src>

<mosaic_0001>
module attributes {stable_mosaic.version = 11 : i64} {
  func.func @_q_sample_kernel(%arg0: i32, %arg1: i32, %arg2: memref<2xi32, #tpu.memory_space<smem>>, %arg3: memref<1000xf32, #tpu.memory_space<smem>>, %arg4: memref<1000xf32, #tpu.memory_space<smem>>, %arg5: memref<1x4x1024xf32, #tpu.memory_space<vmem>>, %arg6: memref<1x4x1024xf32, #tpu.memory_space<vmem>>, %arg7: memref<1x4x1024xf32, #tpu.memory_space<vmem>>) attributes {dimension_semantics = [#tpu.dimension_semantics<parallel>, #tpu.dimension_semantics<parallel>], iteration_bounds = array<i64: 2, 1>, scalar_prefetch = 1 : i64, scratch_operands = 0 : i64, tpu.core_type = #tpu.core_type<tc>, window_params = [{transform_indices = @transform_0, window_bounds = array<i64: 1000>}, {transform_indices = @transform_1, window_bounds = array<i64: 1000>}, {transform_indices = @transform_2, window_bounds = array<i64: 1, 4, 1024>}, {transform_indices = @transform_3, window_bounds = array<i64: 1, 4, 1024>}, {transform_indices = @transform_4, window_bounds = array<i64: 1, 4, 1024>}]} {
    %0 = arith.index_cast %arg0 : i32 to index
    %1 = memref.load %arg2[%0] : memref<2xi32, #tpu.memory_space<smem>>
    %2 = arith.index_cast %1 : i32 to index
    %3 = memref.load %arg3[%2] : memref<1000xf32, #tpu.memory_space<smem>>
    %4 = arith.index_cast %1 : i32 to index
    %5 = memref.load %arg4[%4] : memref<1000xf32, #tpu.memory_space<smem>>
    %c0 = arith.constant 0 : index
    %c0_0 = arith.constant 0 : index
    %c0_1 = arith.constant 0 : index
    %6 = vector.load %arg5[%c0, %c0_0, %c0_1] : memref<1x4x1024xf32, #tpu.memory_space<vmem>>, vector<1x4x1024xf32>
    %7 = vector.shape_cast %6 : vector<1x4x1024xf32> to vector<4x1024xf32>
    %c0_2 = arith.constant 0 : index
    %c0_3 = arith.constant 0 : index
    %c0_4 = arith.constant 0 : index
    %8 = vector.load %arg6[%c0_2, %c0_3, %c0_4] : memref<1x4x1024xf32, #tpu.memory_space<vmem>>, vector<1x4x1024xf32>
    %9 = vector.shape_cast %8 : vector<1x4x1024xf32> to vector<4x1024xf32>
    %10 = vector.broadcast %3 : f32 to vector<4x1024xf32>
    %11 = arith.mulf %10, %7 : vector<4x1024xf32>
    %12 = vector.broadcast %5 : f32 to vector<4x1024xf32>
    %13 = arith.mulf %12, %9 : vector<4x1024xf32>
    %14 = arith.addf %11, %13 : vector<4x1024xf32>
    %c0_5 = arith.constant 0 : index
    %c0_6 = arith.constant 0 : index
    %c0_7 = arith.constant 0 : index
    %15 = vector.load %arg7[%c0_5, %c0_6, %c0_7] : memref<1x4x1024xf32, #tpu.memory_space<vmem>>, vector<1x4x1024xf32>
    %16 = vector.shape_cast %15 : vector<1x4x1024xf32> to vector<4x1024xf32>
    %17 = vector.shape_cast %14 : vector<4x1024xf32> to vector<1x4x1024xf32>
    tpu.vector_store %arg7[%c0_5, %c0_6, %c0_7], %17 {strides = array<i32>} : memref<1x4x1024xf32, #tpu.memory_space<vmem>>, vector<1x4x1024xf32>,
    return
  }
  func.func @transform_0(%arg0: i32, %arg1: i32, %arg2: memref<2xi32, #tpu.memory_space<smem>>) -> i32 {
    %c0_i32 = arith.constant 0 : i32
    %c0_i32_0 = arith.constant 0 : i32
    return %c0_i32 : i32
  }
  func.func @transform_1(%arg0: i32, %arg1: i32, %arg2: memref<2xi32, #tpu.memory_space<smem>>) -> i32 {
    %c0_i32 = arith.constant 0 : i32
    %c0_i32_0 = arith.constant 0 : i32
    return %c0_i32 : i32
  }
  func.func @transform_2(%arg0: i32, %arg1: i32, %arg2: memref<2xi32, #tpu.memory_space<smem>>) -> (i32, i32, i32) {
    %c0_i32 = arith.constant 0 : i32
    %c0_i32_0 = arith.constant 0 : i32
    return %arg0, %arg1, %c0_i32 : i32, i32, i32
  }
  func.func @transform_3(%arg0: i32, %arg1: i32, %arg2: memref<2xi32, #tpu.memory_space<smem>>) -> (i32, i32, i32) {
    %c0_i32 = arith.constant 0 : i32
    %c0_i32_0 = arith.constant 0 : i32
    return %arg0, %arg1, %c0_i32 : i32, i32, i32
  }
  func.func @transform_4(%arg0: i32, %arg1: i32, %arg2: memref<2xi32, #tpu.memory_space<smem>>) -> (i32, i32, i32) {
    %c0_i32 = arith.constant 0 : i32
    %c0_i32_0 = arith.constant 0 : i32
    return %arg0, %arg1, %c0_i32 : i32, i32, i32
  }
}

</mosaic_0001>

<llo_original>
// kernel: tpu_custom_call.1
$region0: #{tpu_custom_call.1}
  #allocation0 [shape = 'u32[]', space=smem, size = 0x4, offset = 0x4, fixed_abs, tag = 'smem constant byte address 0x4 - core index']
  #allocation1 [shape = 'u32[144,128]{1,0:T(1,128)}', space=vmem, size = 0x12000, scoped, tag = 'internal scratch']
  #allocation2 [shape = 's32[1]{0}', space=sflag, size = 0x4, scoped, tag = 'scoped memory for tpu_custom_call.1']
  #allocation3 [shape = 'u8[512]{0}', space=smem, size = 0x200, scoped, tag = 'prefetched SMEM operand 0']
  %s0 = inlined_call_operand.hbm [shape: s32[2], index: 0, kind: input, shape index: {}]
  %s1 = inlined_call_operand.hbm [shape: f32[1000], index: 1, kind: input, shape index: {}]
  %s2 = inlined_call_operand.hbm [shape: f32[1000], index: 2, kind: input, shape index: {}]
  %s3 = inlined_call_operand.hbm [shape: f32[2,4,1024], index: 3, kind: input, shape index: {}]
  %s4 = inlined_call_operand.hbm [shape: f32[2,4,1024], index: 4, kind: input, shape index: {}]
  %s5 = inlined_call_operand.hbm [shape: f32[2,4,1024], index: 5, kind: output, shape index: {}]
  %s6 = sld [smem:[#allocation0]]
  $region65: #{tpu_custom_call.1} parent=0
    _
  %s8 = ssub.s32 1, %s6
  %s9 = scalar_select 0, %s8, %s6
  %11 = dma.hbm_to_smem %s0, 16, [#allocation3], [#allocation2]
  %12 = dma.done [#allocation2], 16
  %13 = sfence
  $region1: #{tpu_custom_call.1} parent=0
    #allocation4 [shape = 'u8[4096]{0}', space=smem, size = 0x1000, scoped, tag = 'input window, operand 1, single buffered']
    #allocation5 [shape = 's32[2]{0}', space=sflag, size = 0x8, scoped, tag = 'scoped memory for tpu_custom_call.1']
    #allocation6 [shape = 's32[2]{0}', space=sflag, size = 0x8, scoped, tag = 'scoped memory for tpu_custom_call.1']
    #allocation7 [shape = 's32[2]{0}', space=sflag, size = 0x8, scoped, tag = 'scoped memory for tpu_custom_call.1']
    #allocation8 [shape = 'u8[4096]{0}', space=smem, size = 0x1000, scoped, tag = 'input window, operand 2, single buffered']
    #allocation9 [shape = 's32[1]{0}', space=sflag, size = 0x4, scoped, tag = 'scoped memory for tpu_custom_call.1']
    #allocation10 [shape = 'u8[32768]{0}', space=vmem, size = 0x8000, scoped, tag = 'input window, operand 3']
    #allocation11 [shape = 'u8[32768]{0}', space=vmem, size = 0x8000, scoped, tag = 'input window, operand 4']
    #allocation12 [shape = 's32[2]{0}', space=sflag, size = 0x8, scoped, tag = 'scoped memory for tpu_custom_call.1']
    #allocation13 [shape = 'u8[32768]{0}', space=vmem, size = 0x8000, scoped, tag = 'output window, operand 0']
    %14 = vsyncpa [#allocation7], 0
    %15 = vsyncpa [#allocation9], 0
    %16 = vsyncpa [#allocation5], 0
    %s17 = scalar_lea.sflag [#allocation5], 1
    %18 = vsyncpa %s17, 0
    %19 = vsyncpa [#allocation12], 0
    %s20 = scalar_lea.sflag [#allocation12], 1
    %21 = vsyncpa %s20, 0
    %22 = vsyncpa [#allocation6], 0
    %s23 = scalar_lea.sflag [#allocation6], 1
    %24 = vsyncpa %s23, 0
    loop: start=0, step=1, limit=4
    $region2: #{tpu_custom_call.1} parent=1 // loop_pre_header
      _
    $region3: #{tpu_custom_call.1} parent=1 // loop_header
      %s26 = sphi 0, %s30
      %p27 = scmp.ge.s32.totalorder %s26, 4
      %s33 = sphi 0, %s45
      %s34 = sphi 0, %s41
      %s35 = sphi 0, %s33
      %s36 = sphi 0, %s34
      %s37 = sphi 0, %s35
      %s38 = sphi 0, %s36
      %s46 = sphi 0, %s46
      %s48 = sphi 0, %s46
      %s49 = sphi 0, %s48
      %s63 = sphi 0, %s49
      %s67 = sphi 0, %s67
      %s69 = sphi 0, %s67
      %s70 = sphi 0, %s69
      %s84 = sphi 0, %s70
      %s92 = sphi 0, %s94
      %s95 = sphi 0, %s92
      %s96 = sphi 0, %s95
      %s112 = sphi 0, %s96
      %s120 = sphi 0, %s122
      %s123 = sphi 0, %s120
      %s124 = sphi 0, %s123
      %s140 = sphi 0, %s124
      %s148 = sphi 0, %s150
      %s151 = sphi 0, %s148
      %s152 = sphi 0, %s151
      %s168 = sphi 0, %s152
    $region4: #{tpu_custom_call.1} parent=1 // loop_header_branch
      %29 = sbr.rel (%p27) target = $region8
    $region5: #{tpu_custom_call.1} parent=1 // loop_body
      %s31 = ssub.s32 %s26, 1
      %s32 = ssub.s32 %s26, 2
      %s39 = sadd.s32 1, %s34
      %p40 = scmp.ge.s32.totalorder %s39, 1
      %s41 = scalar_select %p40, 0, %s39
      %s42 = sadd.s32 1, %s33
      %s43 = scalar_select %p40, %s42, %s33
      %p44 = scmp.ge.s32.totalorder %s43, 2
      %s45 = scalar_select %p44, 0, %s43
      %s47 = sadd.s32 %s46, 1
      %p50 = scmp.eq.s32.totalorder %s26, 1
      %p51 = scmp.ne.s32.totalorder %s46, %s48
      %p52 = scmp.eq.s32.totalorder %s26, 0
      %p53 = por %p51, %p52
      %p54 = scmp.ne.s32.totalorder %s46, %s48
      %p55 = scmp.eq.s32.totalorder %s31, 1
      %p56 = por %p54, %p55
      %p57 = scmp.ne.s32.totalorder %s48, %s49
      %p58 = scmp.eq.s32.totalorder %s31, 0
      %p59 = por %p57, %p58
      %p60 = scmp.ne.s32.totalorder %s48, %s49
      %p61 = scmp.eq.s32.totalorder %s32, 1
      %p62 = por %p60, %p61
      %p64 = scmp.ne.s32.totalorder %s49, %s63
      %p65 = scmp.eq.s32.totalorder %s32, 0
      %p66 = por %p64, %p65
      %s68 = sadd.s32 %s67, 1
      %p71 = scmp.eq.s32.totalorder %s26, 1
      %p72 = scmp.ne.s32.totalorder %s67, %s69
      %p73 = scmp.eq.s32.totalorder %s26, 0
      %p74 = por %p72, %p73
      %p75 = scmp.ne.s32.totalorder %s67, %s69
      %p76 = scmp.eq.s32.totalorder %s31, 1
      %p77 = por %p75, %p76
      %p78 = scmp.ne.s32.totalorder %s69, %s70
      %p79 = scmp.eq.s32.totalorder %s31, 0
      %p80 = por %p78, %p79
      %p81 = scmp.ne.s32.totalorder %s69, %s70
      %p82 = scmp.eq.s32.totalorder %s32, 1
      %p83 = por %p81, %p82
      %p85 = scmp.ne.s32.totalorder %s70, %s84
      %p86 = scmp.eq.s32.totalorder %s32, 0
      %p87 = por %p85, %p86
      %s88 = ssub.s32 %s33, %s45
      %s89 = ssub.s32 %s34, %s41
      %s90 = sor.u32 %s88, %s89
      %p91 = scmp.eq.s32.totalorder %s90, 0
      %s93 = sadd.s32 %s92, 1
      %s94 = scalar_select %p91, %s92, %s93
      %p97 = pneg %p91
      %p98 = scmp.eq.s32.totalorder %s26, 1
      %p99 = por %p97, %p98
      %p100 = scmp.ne.s32.totalorder %s92, %s95
      %p101 = scmp.eq.s32.totalorder %s26, 0
      %p102 = por %p100, %p101
      %p103 = scmp.ne.s32.totalorder %s92, %s95
      %p104 = scmp.eq.s32.totalorder %s31, 1
      %p105 = por %p103, %p104
      %p106 = scmp.ne.s32.totalorder %s95, %s96
      %p107 = scmp.eq.s32.totalorder %s31, 0
      %p108 = por %p106, %p107
      %p109 = scmp.ne.s32.totalorder %s95, %s96
      %p110 = scmp.eq.s32.totalorder %s32, 1
      %p111 = por %p109, %p110
      %p113 = scmp.ne.s32.totalorder %s96, %s112
      %p114 = scmp.eq.s32.totalorder %s32, 0
      %p115 = por %p113, %p114
      %s116 = ssub.s32 %s33, %s45
      %s117 = ssub.s32 %s34, %s41
      %s118 = sor.u32 %s116, %s117
      %p119 = scmp.eq.s32.totalorder %s118, 0
      %s121 = sadd.s32 %s120, 1
      %s122 = scalar_select %p119, %s120, %s121
      %p125 = pneg %p119
      %p126 = scmp.eq.s32.totalorder %s26, 1
      %p127 = por %p125, %p126
      %p128 = scmp.ne.s32.totalorder %s120, %s123
      %p129 = scmp.eq.s32.totalorder %s26, 0
      %p130 = por %p128, %p129
      %p131 = scmp.ne.s32.totalorder %s120, %s123
      %p132 = scmp.eq.s32.totalorder %s31, 1
      %p133 = por %p131, %p132
      %p134 = scmp.ne.s32.totalorder %s123, %s124
      %p135 = scmp.eq.s32.totalorder %s31, 0
      %p136 = por %p134, %p135
      %p137 = scmp.ne.s32.totalorder %s123, %s124
      %p138 = scmp.eq.s32.totalorder %s32, 1
      %p139 = por %p137, %p138
      %p141 = scmp.ne.s32.totalorder %s124, %s140
      %p142 = scmp.eq.s32.totalorder %s32, 0
      %p143 = por %p141, %p142
      %s144 = ssub.s32 %s33, %s45
      %s145 = ssub.s32 %s34, %s41
      %s146 = sor.u32 %s144, %s145
      %p147 = scmp.eq.s32.totalorder %s146, 0
      %s149 = sadd.s32 %s148, 1
      %s150 = scalar_select %p147, %s148, %s149
      %p153 = pneg %p147
      %p154 = scmp.eq.s32.totalorder %s26, 1
      %p155 = por %p153, %p154
      %p156 = scmp.ne.s32.totalorder %s148, %s151
      %p157 = scmp.eq.s32.totalorder %s26, 0
      %p158 = por %p156, %p157
      %p159 = scmp.ne.s32.totalorder %s148, %s151
      %p160 = scmp.eq.s32.totalorder %s31, 1
      %p161 = por %p159, %p160
      %p162 = scmp.ne.s32.totalorder %s151, %s152
      %p163 = scmp.eq.s32.totalorder %s31, 0
      %p164 = por %p162, %p163
      %p165 = scmp.ne.s32.totalorder %s151, %s152
      %p166 = scmp.eq.s32.totalorder %s32, 1
      %p167 = por %p165, %p166
      %p169 = scmp.ne.s32.totalorder %s152, %s168
      %p170 = scmp.eq.s32.totalorder %s32, 0
      %p171 = por %p169, %p170
      %p172 = scmp.le.s32.totalorder 1, %s26
      %p173 = scmp.lt.s32.totalorder %s26, 3
      %p174 = pnand %p172, %p173
      %p175 = pneg %p174
      // Predicated region
      $region9: #{tpu_custom_call.1} parent=5 // pred_check
        _
      $region10: #{tpu_custom_call.1} parent=5 // pred_check_branch
        %177 = sbr.rel (%p174) target = $region12
      $region11: #{tpu_custom_call.1} parent=5 // pred_region
        %s178 = ssub.s32 %s26, 1
        // Predicated region
        $region13: #{tpu_custom_call.1} parent=11 // pred_check
          %p179 = pneg %p59
        $region14: #{tpu_custom_call.1} parent=11 // pred_check_branch
          %181 = sbr.rel (%p179) target = $region16
        $region15: #{tpu_custom_call.1} parent=11 // pred_region
          %s183 = ssub.s32 128, 128
          %184 = vsyncadd [#allocation7], %s183
          %187 = dma.hbm_to_smem %s1, 128, [#allocation4], [#allocation7]
        $region16: #{tpu_custom_call.1} parent=11 // pred_fallthru
          _
        // Predicated region
        $region17: #{tpu_custom_call.1} parent=11 // pred_check
          %p188 = pneg %p80
        $region18: #{tpu_custom_call.1} parent=11 // pred_check_branch
          %190 = sbr.rel (%p188) target = $region20
        $region19: #{tpu_custom_call.1} parent=11 // pred_region
          %s192 = ssub.s32 128, 128
          %193 = vsyncadd [#allocation9], %s192
          %196 = dma.hbm_to_smem %s2, 128, [#allocation8], [#allocation9]
        $region20: #{tpu_custom_call.1} parent=11 // pred_fallthru
          _
      $region12: #{tpu_custom_call.1} parent=5 // pred_fallthru
        _
      %p197 = scmp.lt.s32.totalorder %s26, 2
      // Predicated region
      $region21: #{tpu_custom_call.1} parent=5 // pred_check
        %p198 = pneg %p197
      $region22: #{tpu_custom_call.1} parent=5 // pred_check_branch
        %200 = sbr.rel (%p198) target = $region24
      $region23: #{tpu_custom_call.1} parent=5 // pred_region
        // Predicated region
        $region25: #{tpu_custom_call.1} parent=23 // pred_check
          %p201 = pneg %p102
        $region26: #{tpu_custom_call.1} parent=23 // pred_check_branch
          %203 = sbr.rel (%p201) target = $region28
        $region27: #{tpu_custom_call.1} parent=23 // pred_region
          %s204 = sand.u32 %s92, 1
          %s205 = scalar_lea.sflag [#allocation5], %s204
          %s206 = sand.u32 %s92, 1
          %s207 = smul.addr %s206, 32
          %s208 = scalar_lea.vmem [#allocation10], %s207
          %s210 = ssub.s32 512, 512
          %211 = vsyncadd %s205, %s210
          %s212 = smul.addr %s34, 8
          %s213 = smul.addr %s33, 8
          %s214 = sadd.s32 %s212, %s213
          %s215 = smul.addr %s214, 64
          %s216 = scalar_lea.hbm %s3, %s215
          %s218 = sshll.u32 %s208, 4
          %s219 = int_to_ptr.vmem [resolvable:$true] %s218
          %221 = dma.hbm_to_vmem [thread:$0]  %s216, 512, %s219, %s205
        $region28: #{tpu_custom_call.1} parent=23 // pred_fallthru
          _
        // Predicated region
        $region29: #{tpu_custom_call.1} parent=23 // pred_check
          %p222 = pneg %p130
        $region30: #{tpu_custom_call.1} parent=23 // pred_check_branch
          %224 = sbr.rel (%p222) target = $region32
        $region31: #{tpu_custom_call.1} parent=23 // pred_region
          %s225 = sand.u32 %s120, 1
          %s226 = scalar_lea.sflag [#allocation12], %s225
          %s227 = sand.u32 %s120, 1
          %s228 = smul.addr %s227, 32
          %s229 = scalar_lea.vmem [#allocation11], %s228
          %s231 = ssub.s32 512, 512
          %232 = vsyncadd %s226, %s231
          %s233 = smul.addr %s34, 8
          %s234 = smul.addr %s33, 8
          %s235 = sadd.s32 %s233, %s234
          %s236 = smul.addr %s235, 64
          %s237 = scalar_lea.hbm %s4, %s236
          %s239 = sshll.u32 %s229, 4
          %s240 = int_to_ptr.vmem [resolvable:$true] %s239
          %242 = dma.hbm_to_vmem [thread:$0]  %s237, 512, %s240, %s226
        $region32: #{tpu_custom_call.1} parent=23 // pred_fallthru
          _
      $region24: #{tpu_custom_call.1} parent=5 // pred_fallthru
        _
      %p243 = scmp.le.s32.totalorder 1, %s26
      %p244 = scmp.lt.s32.totalorder %s26, 3
      %p245 = pnand %p243, %p244
      %p246 = pneg %p245
      // Predicated region
      $region33: #{tpu_custom_call.1} parent=5 // pred_check
        _
      $region34: #{tpu_custom_call.1} parent=5 // pred_check_branch
        %248 = sbr.rel (%p245) target = $region36
      $region35: #{tpu_custom_call.1} parent=5 // pred_region
        %s249 = ssub.s32 %s26, 1
        // Predicated region
        $region37: #{tpu_custom_call.1} parent=35 // pred_check
          %p250 = pneg %p59
        $region38: #{tpu_custom_call.1} parent=35 // pred_check_branch
          %252 = sbr.rel (%p250) target = $region40
        $region39: #{tpu_custom_call.1} parent=35 // pred_region
          %253 = dma.done [#allocation7], 128
        $region40: #{tpu_custom_call.1} parent=35 // pred_fallthru
          _
        // Predicated region
        $region41: #{tpu_custom_call.1} parent=35 // pred_check
          %p254 = pneg %p80
        $region42: #{tpu_custom_call.1} parent=35 // pred_check_branch
          %256 = sbr.rel (%p254) target = $region44
        $region43: #{tpu_custom_call.1} parent=35 // pred_region
          %257 = dma.done [#allocation9], 128
        $region44: #{tpu_custom_call.1} parent=35 // pred_fallthru
          _
        %s258 = sand.u32 %s95, 1
        %s259 = scalar_lea.sflag [#allocation5], %s258
        %s260 = sand.u32 %s95, 1
        %s261 = smul.addr %s260, 32
        %s262 = scalar_lea.vmem [#allocation10], %s261
        // Predicated region
        $region45: #{tpu_custom_call.1} parent=35 // pred_check
          %p263 = pneg %p108
        $region46: #{tpu_custom_call.1} parent=35 // pred_check_branch
          %265 = sbr.rel (%p263) target = $region48
        $region47: #{tpu_custom_call.1} parent=35 // pred_region
          %266 = dma.done %s259, 512
        $region48: #{tpu_custom_call.1} parent=35 // pred_fallthru
          _
        %s267 = sand.u32 %s123, 1
        %s268 = scalar_lea.sflag [#allocation12], %s267
        %s269 = sand.u32 %s123, 1
        %s270 = smul.addr %s269, 32
        %s271 = scalar_lea.vmem [#allocation11], %s270
        // Predicated region
        $region49: #{tpu_custom_call.1} parent=35 // pred_check
          %p272 = pneg %p136
        $region50: #{tpu_custom_call.1} parent=35 // pred_check_branch
          %274 = sbr.rel (%p272) target = $region52
        $region51: #{tpu_custom_call.1} parent=35 // pred_region
          %275 = dma.done %s268, 512
        $region52: #{tpu_custom_call.1} parent=35 // pred_fallthru
          _
        %276 = sfence
        %p277 = pneg %p59
        %p278 = pneg %p56
        %p279 = pneg %p80
        %p280 = pneg %p77
        %s281 = sand.u32 %s95, 1
        %s282 = scalar_lea.sflag [#allocation5], %s281
        %s283 = sand.u32 %s95, 1
        %s284 = smul.addr %s283, 32
        %s285 = scalar_lea.vmem [#allocation10], %s284
        %p286 = pneg %p108
        %p287 = pneg %p105
        %s288 = sand.u32 %s123, 1
        %s289 = scalar_lea.sflag [#allocation12], %s288
        %s290 = sand.u32 %s123, 1
        %s291 = smul.addr %s290, 32
        %s292 = scalar_lea.vmem [#allocation11], %s291
        %p293 = pneg %p136
        %p294 = pneg %p133
        %p295 = pneg %p164
        %p296 = pneg %p161
        %s297 = sand.u32 %s151, 1
        %s298 = scalar_lea.sflag [#allocation6], %s297
        %s299 = sand.u32 %s151, 1
        %s300 = smul.addr %s299, 32
        %s301 = scalar_lea.vmem [#allocation13], %s300
        %s302 = sld [smem:[#allocation3 + %s35]]
        %s303 = sld [smem:[#allocation4 + %s302]]
        %s304 = sld [smem:[#allocation8 + %s302]]
        %v305 = vld [vmem:[%s262] sm:$0xff]
        %v306 = vld [vmem:[%s262 + $0x8] sm:$0xff]
        %v307 = vld [vmem:[%s262 + $0x10] sm:$0xff]
        %v308 = vld [vmem:[%s262 + $0x18] sm:$0xff]
        %v309 = vld [vmem:[%s271] sm:$0xff]
        %v310 = vld [vmem:[%s271 + $0x8] sm:$0xff]
        %v311 = vld [vmem:[%s271 + $0x10] sm:$0xff]
        %v312 = vld [vmem:[%s271 + $0x18] sm:$0xff]
        %v313 = vstv %s303
        %v314 = vmul.f32 %v313, %v305
        %v315 = vmul.f32 %v313, %v306
        %v316 = vmul.f32 %v313, %v307
        %v317 = vmul.f32 %v313, %v308
        %v318 = vstv %s304
        %v319 = vmul.f32 %v318, %v309
        %v320 = vmul.f32 %v318, %v310
        %v321 = vmul.f32 %v318, %v311
        %v322 = vmul.f32 %v318, %v312
        %v323 = vadd.f32 %v314, %v319
        %v324 = vadd.f32 %v315, %v320
        %v325 = vadd.f32 %v316, %v321
        %v326 = vadd.f32 %v317, %v322
        %327 = vst [vmem:[%s301] sm:$0xff] %v323
        %328 = vst [vmem:[%s301 + $0x8] sm:$0xff] %v324
        %329 = vst [vmem:[%s301 + $0x10] sm:$0xff] %v325
        %330 = vst [vmem:[%s301 + $0x18] sm:$0xff] %v326
        %s331 = sand.u32 %s151, 1
        %s332 = scalar_lea.sflag [#allocation6], %s331
        %s333 = sand.u32 %s151, 1
        %s334 = smul.addr %s333, 32
        %s335 = scalar_lea.vmem [#allocation13], %s334
        // Predicated region
        $region53: #{tpu_custom_call.1} parent=35 // pred_check
          %p336 = pneg %p161
        $region54: #{tpu_custom_call.1} parent=35 // pred_check_branch
          %338 = sbr.rel (%p336) target = $region56
        $region55: #{tpu_custom_call.1} parent=35 // pred_region
          %s340 = ssub.s32 512, 512
          %341 = vsyncadd %s332, %s340
          %s342 = smul.addr %s36, 8
          %s343 = smul.addr %s35, 8
          %s344 = sadd.s32 %s342, %s343
          %s345 = smul.addr %s344, 64
          %s346 = scalar_lea.hbm %s5, %s345
          %s348 = sshll.u32 %s335, 4
          %s349 = int_to_ptr.vmem [resolvable:$true] %s348
          %351 = dma.vmem_to_hbm [thread:$0]  %s349, 512, %s346, %s332
        $region56: #{tpu_custom_call.1} parent=35 // pred_fallthru
          _
      $region36: #{tpu_custom_call.1} parent=5 // pred_fallthru
        _
      %p352 = scmp.le.s32.totalorder 2, %s26
      // Predicated region
      $region57: #{tpu_custom_call.1} parent=5 // pred_check
        %p353 = pneg %p352
      $region58: #{tpu_custom_call.1} parent=5 // pred_check_branch
        %355 = sbr.rel (%p353) target = $region60
      $region59: #{tpu_custom_call.1} parent=5 // pred_region
        %s356 = ssub.s32 %s26, 2
        // Predicated region
        $region61: #{tpu_custom_call.1} parent=59 // pred_check
          %p357 = pneg %p167
        $region62: #{tpu_custom_call.1} parent=59 // pred_check_branch
          %359 = sbr.rel (%p357) target = $region64
        $region63: #{tpu_custom_call.1} parent=59 // pred_region
          %s360 = sand.u32 %s152, 1
          %s361 = scalar_lea.sflag [#allocation6], %s360
          %s362 = sand.u32 %s152, 1
          %s363 = smul.addr %s362, 32
          %s364 = scalar_lea.vmem [#allocation13], %s363
          %365 = dma.done %s361, 512
        $region64: #{tpu_custom_call.1} parent=59 // pred_fallthru
          _
      $region60: #{tpu_custom_call.1} parent=5 // pred_fallthru
        _
    $region6: #{tpu_custom_call.1} parent=1 // loop_footer
      %s30 = sadd.s32 1, %s26
    $region7: #{tpu_custom_call.1} parent=1 // loop_footer_branch
      %25 = sbr.rel target = $region3
    $region8: #{tpu_custom_call.1} parent=1 // loop_exit
      _
    %366 = vsyncpa [#allocation5], 1
    %s367 = scalar_lea.sflag [#allocation5], 1
    %368 = vsyncpa %s367, 1
    %369 = vsyncpa [#allocation12], 1
    %s370 = scalar_lea.sflag [#allocation12], 1
    %371 = vsyncpa %s370, 1
    %372 = vsyncpa [#allocation6], 1
    %s373 = scalar_lea.sflag [#allocation6], 1
    %374 = vsyncpa %s373, 1
    %375 = vsyncpa [#allocation7], 1
    %s376 = scalar_lea.sflag [#allocation7], 1
    %377 = vsyncpa %s376, 1
    %378 = vsyncpa [#allocation9], 1

</llo_original>
